<compile_context>
chip_gen: v7x
topology: tpu7x:2x2x1
jax: 0.10.0
libtpu: 0.0.40
codegen_flags: <defaults>
</compile_context>

<pallas_src>
import jax
import jax.numpy as jnp
from jax.experimental import pallas as pl
from jax.experimental.pallas import tpu as pltpu


# ----------------------------- Pallas kernel --------------------------------

def _row_scale_kernel(scale_ref, x_ref, o_ref):
    # scale_ref: (tm, 1) f32   -- per-row (i.e. per batch*channel) scale
    # x_ref/o_ref: (tm, tn)    -- lane-dense streaming tile
    o_ref[...] = (x_ref[...] * scale_ref[...]).astype(o_ref.dtype)


def _row_scale_multiply(x2d: jax.Array, scale_col: jax.Array) -> jax.Array:
    """x2d: [R, L]; scale_col: [R, 1] f32  ->  x2d * scale_col (row broadcast)."""
    R, L = x2d.shape

    # Lane-dense tiling: last block dim a multiple of 128 (or the full dim),
    # sublane dim a multiple of 8 (or the full dim).  ~<=1 MiB per f32 block.
    tm = min(R, 256) if R % 8 == 0 else R
    tn = min(L, 1024) if L % 128 == 0 else L
    grid = (pl.cdiv(R, tm), pl.cdiv(L, tn))

    return pl.pallas_call(
        _row_scale_kernel,
        out_shape=jax.ShapeDtypeStruct((R, L), x2d.dtype),
        grid_spec=pltpu.PrefetchScalarGridSpec(
            num_scalar_prefetch=0,
            grid=grid,
            in_specs=[
                # (tm, 1) scale column: constant across the lane axis, so the
                # DMA is elided on consecutive j steps; sublane broadcast in VPU.
                pl.BlockSpec((tm, 1), lambda i, j: (i, 0)),
                pl.BlockSpec((tm, tn), lambda i, j: (i, j)),
            ],
            out_specs=pl.BlockSpec((tm, tn), lambda i, j: (i, j)),
        ),
        compiler_params=pltpu.CompilerParams(
            dimension_semantics=("parallel", "parallel")),
    )(scale_col, x2d)


# --------------------------- module-level wrappers ---------------------------

def activation_layer(inputs: jax.Array, betas: jax.Array,
                     weight: jax.Array, bias: jax.Array) -> jax.Array:
    """ActivationLayer forward for 4-D inputs.

    inputs: [B, C, H, W]; betas: [B, 1]; weight: [C, 1]; bias: [C].
    """
    B, C, H, W = inputs.shape
    # Tiny Linear(1 -> C): B*C elements, precomputed with plain XLA.
    scale = (betas.astype(jnp.float32) @ weight.reshape(1, C).astype(jnp.float32)
             + bias.astype(jnp.float32)[None, :])                    # [B, C]
    scale_col = scale.reshape(B * C, 1)                              # [B*C, 1]
    x2d = inputs.reshape(B * C, H * W)                               # lane-dense view
    out2d = _row_scale_multiply(x2d, scale_col)
    return out2d.reshape(B, C, H, W)


def conv_transpose_nchw(x, w, b, stride, padding, output_padding):
    """PyTorch-style ConvTranspose2d.

    x: [B, Cin, H, W]; w: [Cin, Cout, kH, kW]; b: [Cout] or None.
    """
    kH, kW = w.shape[2], w.shape[3]
    # transpose-conv == conv of lhs-dilated input with flipped, channel-swapped kernel
    w_conv = jnp.flip(w, axis=(2, 3)).transpose(1, 0, 2, 3)          # [Cout, Cin, kH, kW]
    pad_h = (kH - 1 - padding, kH - 1 - padding + output_padding)
    pad_w = (kW - 1 - padding, kW - 1 - padding + output_padding)
    y = jax.lax.conv_general_dilated(
        x, w_conv,
        window_strides=(1, 1),
        padding=(pad_h, pad_w),
        lhs_dilation=(stride, stride),
        rhs_dilation=(1, 1),
        dimension_numbers=("NCHW", "OIHW", "NCHW"))
    if b is not None:
        y = y + b[None, :, None, None]
    return y


def activated_deconv2d(x, betas, deconv_w, deconv_b, scale_w, scale_b,
                       stride=1, padding=0, output_padding=0):
    """ActivatedDeconv2d forward: ConvTranspose2d -> hyper-scale (Pallas)."""
    y = conv_transpose_nchw(x, deconv_w, deconv_b, stride, padding, output_padding)
    return activation_layer(y, betas, scale_w, scale_b)


def init_scale_params(features: int, key: jax.Array):
    """Shapes/init matching ActivationLayer.hyper_block_scale (Linear(1, features)).

    weight: xavier_uniform_ on (features, 1) -> U(-a, a), a = sqrt(6/(1+features))
    bias:   nn.Linear default with fan_in=1  -> U(-1, 1)
    """
    k_w, k_b = jax.random.split(key)
    a = (6.0 / (1 + features)) ** 0.5
    weight = jax.random.uniform(k_w, (features, 1), jnp.float32, -a, a)
    bias = jax.random.uniform(k_b, (features,), jnp.float32, -1.0, 1.0)
    return weight, bias


# ----------------------------------- demo ------------------------------------

if __name__ == "__main__":
    key = jax.random.PRNGKey(0)
    k_x, k_beta, k_dw, k_db, k_sp = jax.random.split(key, 5)

    B, Cin, Cout, H, W = 2, 4, 8, 16, 16
    k_size, stride, padding, output_padding = 3, 2, 1, 1   # -> 32x32 output

    x = jax.random.normal(k_x, (B, Cin, H, W), jnp.float32)
    betas = jax.random.normal(k_beta, (B, 1), jnp.float32)
    deconv_w = 0.1 * jax.random.normal(k_dw, (Cin, Cout, k_size, k_size), jnp.float32)
    deconv_b = 0.1 * jax.random.normal(k_db, (Cout,), jnp.float32)
    scale_w, scale_b = init_scale_params(Cout, k_sp)

    out = activated_deconv2d(x, betas, deconv_w, deconv_b, scale_w, scale_b,
                             stride=stride, padding=padding,
                             output_padding=output_padding)
    out = jax.block_until_ready(out)

    # Pure-JAX reference of the full forward.
    y_ref = conv_transpose_nchw(x, deconv_w, deconv_b, stride, padding, output_padding)
    scale_ref = (betas @ scale_w.T + scale_b)[:, :, None, None]      # [B, Cout, 1, 1]
    ref = scale_ref * y_ref

    Hout = (H - 1) * stride - 2 * padding + k_size + output_padding
    Wout = (W - 1) * stride - 2 * padding + k_size + output_padding
    assert out.shape == (B, Cout, Hout, Wout), out.shape
    assert jnp.allclose(out, ref, atol=1e-5, rtol=1e-5), "mismatch vs reference"

    print("KERNEL_OK")
</pallas_src>

<mosaic_0001>
module attributes {stable_mosaic.version = 11 : i64} {
  func.func @_row_scale_kernel(%arg0: i32, %arg1: i32, %arg2: memref<16x1xf32, #tpu.memory_space<vmem>>, %arg3: memref<16x1024xf32, #tpu.memory_space<vmem>>, %arg4: memref<16x1024xf32, #tpu.memory_space<vmem>>) attributes {dimension_semantics = [#tpu.dimension_semantics<parallel>, #tpu.dimension_semantics<parallel>], iteration_bounds = array<i64: 1, 1>, scalar_prefetch = 0 : i64, scratch_operands = 0 : i64, tpu.core_type = #tpu.core_type<tc>, window_params = [{transform_indices = @transform_0, window_bounds = array<i64: 16, 1>}, {transform_indices = @transform_1, window_bounds = array<i64: 16, 1024>}, {transform_indices = @transform_2, window_bounds = array<i64: 16, 1024>}]} {
    %c0 = arith.constant 0 : index
    %c0_0 = arith.constant 0 : index
    %0 = vector.load %arg3[%c0, %c0_0] : memref<16x1024xf32, #tpu.memory_space<vmem>>, vector<16x1024xf32>
    %c0_1 = arith.constant 0 : index
    %c0_2 = arith.constant 0 : index
    %1 = vector.load %arg2[%c0_1, %c0_2] : memref<16x1xf32, #tpu.memory_space<vmem>>, vector<16x1xf32>
    %2 = vector.broadcast %1 : vector<16x1xf32> to vector<16x1024xf32>
    %3 = arith.mulf %0, %2 : vector<16x1024xf32>
    %c0_3 = arith.constant 0 : index
    %c0_4 = arith.constant 0 : index
    %4 = vector.load %arg4[%c0_3, %c0_4] : memref<16x1024xf32, #tpu.memory_space<vmem>>, vector<16x1024xf32>
    tpu.vector_store %arg4[%c0_3, %c0_4], %3 {strides = array<i32>} : memref<16x1024xf32, #tpu.memory_space<vmem>>, vector<16x1024xf32>,
    return
  }
  func.func @transform_0(%arg0: i32, %arg1: i32) -> (i32, i32) {
    %c0_i32 = arith.constant 0 : i32
    %c0_i32_0 = arith.constant 0 : i32
    return %arg0, %c0_i32 : i32, i32
  }
  func.func @transform_1(%arg0: i32, %arg1: i32) -> (i32, i32) {
    %c0_i32 = arith.constant 0 : i32
    return %arg0, %arg1 : i32, i32
  }
  func.func @transform_2(%arg0: i32, %arg1: i32) -> (i32, i32) {
    %c0_i32 = arith.constant 0 : i32
    return %arg0, %arg1 : i32, i32
  }
}

</mosaic_0001>

<llo_original>
// kernel: tpu_custom_call.1
$region0: #{tpu_custom_call.1}
  #allocation0 [shape = 'u32[]', space=smem, size = 0x4, offset = 0x4, fixed_abs, tag = 'smem constant byte address 0x4 - core index']
  #allocation1 [shape = 'u32[144,128]{1,0:T(1,128)}', space=vmem, size = 0x12000, scoped, tag = 'internal scratch']
  %s0 = inlined_call_operand.vmem [shape: f32[16,1], index: 0, kind: input, shape index: {}]
  %s1 = inlined_call_operand.hbm [shape: f32[16,1024], index: 1, kind: input, shape index: {}]
  %s2 = inlined_call_operand.hbm [shape: f32[16,1024], index: 2, kind: output, shape index: {}]
  %s3 = sld [smem:[#allocation0]]
  $region22: #{tpu_custom_call.1} parent=0
    _
  %s5 = ssub.s32 1, %s3
  %s6 = scalar_select 0, %s5, %s3
  $region1: #{tpu_custom_call.1} parent=0
    #allocation2 [shape = 'u8[65536]{0}', space=vmem, size = 0x10000, scoped, tag = 'input window, operand 1, single buffered']
    #allocation3 [shape = 's32[1]{0}', space=sflag, size = 0x4, scoped, tag = 'scoped memory for tpu_custom_call.1']
    #allocation4 [shape = 's32[1]{0}', space=sflag, size = 0x4, scoped, tag = 'scoped memory for tpu_custom_call.1']
    #allocation5 [shape = 'u8[65536]{0}', space=vmem, size = 0x10000, scoped, tag = 'output window, operand 0, single buffered']
    %7 = vsyncpa [#allocation3], 0
    %8 = vsyncpa [#allocation4], 0
    // Predicated region
    $region2: #{tpu_custom_call.1} parent=1 // pred_check
      _
    $region3: #{tpu_custom_call.1} parent=1 // pred_check_branch
      %10 = sbr.rel (0) target = $region5
    $region4: #{tpu_custom_call.1} parent=1 // pred_region
      _
    $region5: #{tpu_custom_call.1} parent=1 // pred_fallthru
      _
    // Predicated region
    $region6: #{tpu_custom_call.1} parent=1 // pred_check
      _
    $region7: #{tpu_custom_call.1} parent=1 // pred_check_branch
      %12 = sbr.rel (0) target = $region9
    $region8: #{tpu_custom_call.1} parent=1 // pred_region
      %s14 = ssub.s32 2048, 2048
      %15 = vsyncadd [#allocation3], %s14
      %s16 = sshll.u32 [#allocation2], 4
      %s17 = int_to_ptr.vmem [resolvable:$true] %s16
      %22 = dma.hbm_to_vmem [thread:$0]  %s1, 2048, %s17, [#allocation3], 1024, 1024, 64
    $region9: #{tpu_custom_call.1} parent=1 // pred_fallthru
      _
    // Predicated region
    $region10: #{tpu_custom_call.1} parent=1 // pred_check
      _
    $region11: #{tpu_custom_call.1} parent=1 // pred_check_branch
      %24 = sbr.rel (0) target = $region13
    $region12: #{tpu_custom_call.1} parent=1 // pred_region
      %25 = dma.done [#allocation3], 2048
    $region13: #{tpu_custom_call.1} parent=1 // pred_fallthru
      _
    %v26 = vld [vmem:[#allocation2] sm:$0xff]
    %v27 = vld [vmem:[#allocation2 + $0x8] sm:$0xff]
    %v28 = vld [vmem:[#allocation2 + $0x10] sm:$0xff]
    %v29 = vld [vmem:[#allocation2 + $0x18] sm:$0xff]
    %v30 = vld [vmem:[#allocation2 + $0x20] sm:$0xff]
    %v31 = vld [vmem:[#allocation2 + $0x28] sm:$0xff]
    %v32 = vld [vmem:[#allocation2 + $0x30] sm:$0xff]
    %v33 = vld [vmem:[#allocation2 + $0x38] sm:$0xff]
    %v34 = vld [vmem:[#allocation2 + $0x40] sm:$0xff]
    %v35 = vld [vmem:[#allocation2 + $0x48] sm:$0xff]
    %v36 = vld [vmem:[#allocation2 + $0x50] sm:$0xff]
    %v37 = vld [vmem:[#allocation2 + $0x58] sm:$0xff]
    %v38 = vld [vmem:[#allocation2 + $0x60] sm:$0xff]
    %v39 = vld [vmem:[#allocation2 + $0x68] sm:$0xff]
    %v40 = vld [vmem:[#allocation2 + $0x70] sm:$0xff]
    %v41 = vld [vmem:[#allocation2 + $0x78] sm:$0xff]
    %v42 = vld [vmem:[%s0] sm:$0xff]
    %v43 = vld [vmem:[%s0 + $0x8] sm:$0xff]
    %45 = vset.pattern.permute.xlu0 0
    %46 = vperm.xlu0 %45, %v42
    %v47 = vpop.permute.xlu0 %46
    %50 = vset.pattern.permute.xlu0 0
    %51 = vperm.xlu0 %50, %v43
    %v52 = vpop.permute.xlu0 %51
    %v54 = vmul.f32 %v26, %v47
    %v55 = vmul.f32 %v27, %v47
    %v56 = vmul.f32 %v28, %v47
    %v57 = vmul.f32 %v29, %v47
    %v58 = vmul.f32 %v30, %v47
    %v59 = vmul.f32 %v31, %v47
    %v60 = vmul.f32 %v32, %v47
    %v61 = vmul.f32 %v33, %v47
    %v62 = vmul.f32 %v34, %v52
    %v63 = vmul.f32 %v35, %v52
    %v64 = vmul.f32 %v36, %v52
    %v65 = vmul.f32 %v37, %v52
    %v66 = vmul.f32 %v38, %v52
    %v67 = vmul.f32 %v39, %v52
    %v68 = vmul.f32 %v40, %v52
    %v69 = vmul.f32 %v41, %v52
    %70 = vst [vmem:[#allocation5] sm:$0xff] %v54
    %71 = vst [vmem:[#allocation5 + $0x8] sm:$0xff] %v55
    %72 = vst [vmem:[#allocation5 + $0x10] sm:$0xff] %v56
    %73 = vst [vmem:[#allocation5 + $0x18] sm:$0xff] %v57
    %74 = vst [vmem:[#allocation5 + $0x20] sm:$0xff] %v58
    %75 = vst [vmem:[#allocation5 + $0x28] sm:$0xff] %v59
    %76 = vst [vmem:[#allocation5 + $0x30] sm:$0xff] %v60
    %77 = vst [vmem:[#allocation5 + $0x38] sm:$0xff] %v61
    %78 = vst [vmem:[#allocation5 + $0x40] sm:$0xff] %v62
    %79 = vst [vmem:[#allocation5 + $0x48] sm:$0xff] %v63
    %80 = vst [vmem:[#allocation5 + $0x50] sm:$0xff] %v64
    %81 = vst [vmem:[#allocation5 + $0x58] sm:$0xff] %v65
    %82 = vst [vmem:[#allocation5 + $0x60] sm:$0xff] %v66
    %83 = vst [vmem:[#allocation5 + $0x68] sm:$0xff] %v67
    %84 = vst [vmem:[#allocation5 + $0x70] sm:$0xff] %v68
    %85 = vst [vmem:[#allocation5 + $0x78] sm:$0xff] %v69
    // Predicated region
    $region14: #{tpu_custom_call.1} parent=1 // pred_check
      _
    $region15: #{tpu_custom_call.1} parent=1 // pred_check_branch
      %87 = sbr.rel (0) target = $region17
    $region16: #{tpu_custom_call.1} parent=1 // pred_region
      %s89 = ssub.s32 2048, 2048
      %90 = vsyncadd [#allocation4], %s89
      %s91 = sshll.u32 [#allocation5], 4
      %s92 = int_to_ptr.vmem [resolvable:$true] %s91
      %97 = dma.vmem_to_hbm [thread:$0]  %s92, 2048, %s2, [#allocation4], 1024, 1024, 64
    $region17: #{tpu_custom_call.1} parent=1 // pred_fallthru
      _
    // Predicated region
    $region18: #{tpu_custom_call.1} parent=1 // pred_check
      _
    $region19: #{tpu_custom_call.1} parent=1 // pred_check_branch
      %99 = sbr.rel (0) target = $region21
    $region20: #{tpu_custom_call.1} parent=1 // pred_region
      %100 = dma.done [#allocation4], 2048
    $region21: #{tpu_custom_call.1} parent=1 // pred_fallthru
      _
    %101 = vsyncpa [#allocation3], 1
    %102 = vsyncpa [#allocation4], 1

</llo_original>
